<compile_context>
chip_gen: v7x
topology: tpu7x:2x2x1
jax: 0.10.0
libtpu: 0.0.40
codegen_flags: <defaults>
</compile_context>

<pallas_src>
import functools

import jax
import jax.numpy as jnp
from jax import lax
from jax.experimental import pallas as pl
from jax.experimental.pallas import tpu as pltpu

_LANE = 128
_SUB = 8                              # f32 sublane quantum / accumulator rows
_CHUNK_ROWS = 512                     # 512*128*4B = 256 KiB f32 compute chunk
_TARGET_BLOCK_BYTES = 4 * 1024 * 1024  # per-input DMA block (widest dtype)
_VMEM_LIMIT_BYTES = 32 * 1024 * 1024
_SMALL_N = _SUB * _LANE               # below this, pure JAX beats launch cost


def _round_up(a, b):
    return ((a + b - 1) // b) * b


def _sublane_quantum(dtype):
    # Sublane multiple required by the packed layout of `dtype`
    # (f32 -> 8, bf16 -> 16, int8/bool -> 32).
    return max(_SUB, 32 // jnp.dtype(dtype).itemsize)


def dice_loss_ref(inputs, targets, smooth=1.0):
    """Pure-JAX reference mirroring the PyTorch module."""
    p = jax.nn.sigmoid(inputs.astype(jnp.float32)).reshape(-1)
    t = targets.astype(jnp.float32).reshape(-1)
    inter = jnp.sum(p * t)
    dice = (2.0 * inter + smooth) / (jnp.sum(p) + jnp.sum(t) + smooth)
    return 1.0 - dice


def _dice_partial_kernel(x_ref, t_ref, out_ref, *, n_valid, block_rows,
                         chunk_rows, steps_per_split, exact):
    c = pl.program_id(0)   # split (TensorCore) index      -- "parallel"
    i = pl.program_id(1)   # block index within the split  -- "arbitrary"

    @pl.when(i == 0)
    def _init():
        out_ref[...] = jnp.zeros_like(out_ref)

    block_elems = block_rows * _LANE
    chunk_elems = chunk_rows * _LANE
    num_chunks = block_rows // chunk_rows

    def _chunk_sums(ci, mask_rem):
        # Per-chunk load keeps vector temporaries bounded (~256 KiB f32).
        r0 = pl.multiple_of(ci * chunk_rows, chunk_rows)
        xb = x_ref[pl.ds(r0, chunk_rows), :].astype(jnp.float32)
        tb = t_ref[pl.ds(r0, chunk_rows), :].astype(jnp.float32)
        # sigmoid(x) = 0.5*tanh(0.5*x) + 0.5 : a single EUP transcendental
        # per vreg instead of exp + reciprocal.
        p = 0.5 * jnp.tanh(0.5 * xb) + 0.5
        if mask_rem is not None:
            # Mask elements past the logical end of the flattened input
            # (covers jnp.pad zeros, unspecified partial-block rows, and any
            # redundant clamped block).  Chunk-local indices vs. a scalar
            # remainder keep the vector expression block-invariant.
            rows_i = lax.broadcasted_iota(jnp.int32, p.shape, 0)
            lanes_i = lax.broadcasted_iota(jnp.int32, p.shape, 1)
            valid = rows_i * _LANE + lanes_i < mask_rem
            p = jnp.where(valid, p, 0.0)
            tb = jnp.where(valid, tb, 0.0)
        pr = p.reshape(-1, _SUB, _LANE)
        tr = tb.reshape(-1, _SUB, _LANE)
        return (jnp.sum(pr * tr, axis=0),   # intersection partial
                jnp.sum(pr, axis=0),        # sum(sigmoid(x)) partial
                jnp.sum(tr, axis=0))        # sum(targets) partial

    zeros3 = (jnp.zeros((_SUB, _LANE), jnp.float32),) * 3

    def _fast_body(ci, carry):
        a, b, d = carry
        da, db, dd = _chunk_sums(ci, None)
        return (a + da, b + db, d + dd)

    def _accum(parts):
        inter, sp, st = parts
        out_ref[0] += inter
        out_ref[1] += sp
        out_ref[2] += st

    if exact:
        # Coverage == n (trace-time): every block is fully valid, no mask code
        # is emitted at all.
        _accum(lax.fori_loop(0, num_chunks, _fast_body, zeros3))
    else:
        blk = c * steps_per_split + i          # logical (unclamped) block id
        rem = n_valid - blk * block_elems      # valid elems left at block start

        def _masked_body(ci, carry):
            a, b, d = carry
            da, db, dd = _chunk_sums(ci, rem - ci * chunk_elems)
            return (a + da, b + db, d + dd)

        @pl.when(rem >= block_elems)           # interior block: zero mask cost
        def _full():
            _accum(lax.fori_loop(0, num_chunks, _fast_body, zeros3))

        @pl.when(jnp.logical_and(rem > 0, rem < block_elems))
        def _tail():                           # ragged tail / padded rows
            _accum(lax.fori_loop(0, num_chunks, _masked_body, zeros3))
        # rem <= 0: redundant clamped block (odd-split fallback) contributes
        # nothing and is skipped.


def dice_loss(inputs, targets, smooth=1.0):
    """Pallas equivalent of DiceLoss.forward(inputs, targets, smooth)."""
    x = inputs.reshape(-1)
    t = targets.reshape(-1)
    n = int(x.shape[0])

    # Tiny inputs: pallas_call launch overhead dominates; pure JAX is exact.
    if n <= _SMALL_N:
        return dice_loss_ref(inputs, targets, smooth)

    sub = max(_sublane_quantum(x.dtype), _sublane_quantum(t.dtype))
    max_itemsize = max(jnp.dtype(x.dtype).itemsize, jnp.dtype(t.dtype).itemsize)

    # Byte-targeted DMA block: ~4 MiB of the widest input per grid step.
    max_block_rows = max(_CHUNK_ROWS,
                         _TARGET_BLOCK_BYTES // (_LANE * max_itemsize))

    rows = pl.cdiv(n, _LANE)
    rows_p = _round_up(max(rows, sub), sub)
    if rows_p > _CHUNK_ROWS:
        rows_p = _round_up(rows_p, _CHUNK_ROWS)   # keep chunking exact

    padded = rows_p * _LANE
    if padded != n:
        # Padded values are masked in-kernel; the zero fill only serves the
        # (rows_p, 128) reshape.
        x = jnp.pad(x, (0, padded - n))
        t = jnp.pad(t, (0, padded - n))
    x2 = x.reshape(rows_p, _LANE)
    t2 = t.reshape(rows_p, _LANE)

    if rows_p <= max_block_rows:
        block_rows = rows_p
        num_blocks = 1
        num_splits = 1
    else:
        block_rows = max_block_rows
        num_blocks = pl.cdiv(rows_p, block_rows)
        num_splits = 2     # v7x megacore split; harmless serial loop on 1-TC chips
        if num_blocks % 2:
            # Shrink block_rows (chunk-aligned) so the two splits cover the
            # blocks exactly — no clamped redundant re-fetch on either core.
            cand_rows = _round_up(pl.cdiv(rows_p, num_blocks + 1), _CHUNK_ROWS)
            cand_blocks = pl.cdiv(rows_p, cand_rows)
            if cand_blocks % 2 == 0:
                block_rows, num_blocks = cand_rows, cand_blocks

    steps_per_split = pl.cdiv(num_blocks, num_splits)
    chunk_rows = _CHUNK_ROWS if block_rows % _CHUNK_ROWS == 0 else block_rows

    block_elems = block_rows * _LANE
    if n + 2 * block_elems >= 2 ** 31:
        raise ValueError("dice_loss Pallas kernel uses int32 index math; "
                         "input has too many elements")

    coverage = num_splits * steps_per_split * block_elems
    exact = coverage == n   # invariant: coverage > n  =>  in-kernel mask on

    def row_map(c, i):
        # Clamp so the (rare) odd-split fallback never indexes past the array;
        # the kernel skips clamped-redundant blocks via rem <= 0.
        return (jnp.minimum(c * steps_per_split + i, num_blocks - 1), 0)

    kernel = functools.partial(
        _dice_partial_kernel,
        n_valid=n,
        block_rows=block_rows,
        chunk_rows=chunk_rows,
        steps_per_split=steps_per_split,
        exact=exact,
    )

    out_bytes = num_splits * 3 * _SUB * _LANE * 4
    cost = pl.CostEstimate(flops=8 * n, transcendentals=n,
                           bytes_accessed=x2.nbytes + t2.nbytes + out_bytes)

    partials = pl.pallas_call(
        kernel,
        out_shape=jax.ShapeDtypeStruct((num_splits, 3, _SUB, _LANE),
                                       jnp.float32),
        grid_spec=pltpu.PrefetchScalarGridSpec(
            num_scalar_prefetch=0,
            grid=(num_splits, steps_per_split),
            in_specs=[
                pl.BlockSpec((block_rows, _LANE), row_map),
                pl.BlockSpec((block_rows, _LANE), row_map),
            ],
            # Leading dim squeezed; block index ignores the reduction axis, so
            # the (3,8,128) partial stays resident and is accumulated in place.
            out_specs=pl.BlockSpec((None, 3, _SUB, _LANE),
                                   lambda c, i: (c, 0, 0, 0)),
        ),
        compiler_params=pltpu.CompilerParams(
            # TODO(synk): verify on v7x xprof that "parallel" shards the split
            # axis across both TensorCores; if not, switch to CORE_PARALLEL.
            dimension_semantics=("parallel", "arbitrary"),
            vmem_limit_bytes=_VMEM_LIMIT_BYTES,
        ),
        cost_estimate=cost,
    )(x2, t2)

    # Final cross-lane/sublane reduction + dice formula: a few KiB of work.
    sums = jnp.sum(partials, axis=(0, 2, 3))          # -> (3,)
    intersection, sum_p, sum_t = sums[0], sums[1], sums[2]
    dice = (2.0 * intersection + smooth) / (sum_p + sum_t + smooth)
    return 1.0 - dice


if __name__ == "__main__":
    key = jax.random.PRNGKey(0)
    k1, k2, k3, k4, k5, k6 = jax.random.split(key, 6)

    # Segmentation-style logits / binary targets, NCHW: (2, 4, 16, 16).
    x = jax.random.normal(k1, (2, 4, 16, 16), dtype=jnp.float32)
    tgt = (jax.random.uniform(k2, (2, 4, 16, 16)) > 0.5).astype(jnp.float32)
    loss = jax.block_until_ready(dice_loss(x, tgt, smooth=1.0))
    ref = jax.block_until_ready(dice_loss_ref(x, tgt, smooth=1.0))
    assert jnp.allclose(loss, ref, rtol=1e-5, atol=1e-5), (loss, ref)

    # Ragged case: exercises the gated in-kernel tail mask.
    xr = jax.random.normal(k3, (3, 5, 7, 13), dtype=jnp.float32)
    tr = (jax.random.uniform(k4, (3, 5, 7, 13)) > 0.5).astype(jnp.float32)
    loss_r = jax.block_until_ready(dice_loss(xr, tr, smooth=1.0))
    ref_r = jax.block_until_ready(dice_loss_ref(xr, tr, smooth=1.0))
    assert jnp.allclose(loss_r, ref_r, rtol=1e-5, atol=1e-5), (loss_r, ref_r)

    # Multi-block case: exercises the 2-way split, the full-block fast path
    # and the masked last block.
    xb = jax.random.normal(k5, (2, 4, 368, 368), dtype=jnp.float32)
    tb = (jax.random.uniform(k6, (2, 4, 368, 368)) > 0.5).astype(jnp.float32)
    loss_b = jax.block_until_ready(dice_loss(xb, tb, smooth=1.0))
    ref_b = jax.block_until_ready(dice_loss_ref(xb, tb, smooth=1.0))
    assert jnp.allclose(loss_b, ref_b, rtol=1e-4, atol=1e-4), (loss_b, ref_b)

    print("KERNEL_OK")
</pallas_src>

<mosaic_0001>
module attributes {stable_mosaic.version = 11 : i64} {
  func.func @_dice_partial_kernel(%arg0: i32, %arg1: i32, %arg2: memref<16x128xf32, #tpu.memory_space<vmem>>, %arg3: memref<16x128xf32, #tpu.memory_space<vmem>>, %arg4: memref<1x3x8x128xf32, #tpu.memory_space<vmem>>) attributes {dimension_semantics = [#tpu.dimension_semantics<parallel>, #tpu.dimension_semantics<arbitrary>], iteration_bounds = array<i64: 1, 1>, scalar_prefetch = 0 : i64, scratch_operands = 0 : i64, tpu.core_type = #tpu.core_type<tc>, window_params = [{transform_indices = @transform_0, window_bounds = array<i64: 16, 128>}, {transform_indices = @transform_1, window_bounds = array<i64: 16, 128>}, {transform_indices = @transform_2, window_bounds = array<i64: 1, 3, 8, 128>}]} {
    %c0_i32 = arith.constant 0 : i32
    %0 = arith.cmpi eq, %arg1, %c0_i32 : i32
    %1 = arith.extui %0 : i1 to i32
    %c0_i32_0 = arith.constant 0 : i32
    %2 = arith.cmpi ne, %1, %c0_i32_0 : i32
    scf.if %2 {
      %cst_31 = arith.constant 0.000000e+00 : f32
      %44 = vector.broadcast %cst_31 : f32 to vector<3x8x128xf32>
      %c0_32 = arith.constant 0 : index
      %c0_33 = arith.constant 0 : index
      %c0_34 = arith.constant 0 : index
      %c0_35 = arith.constant 0 : index
      %45 = vector.load %arg4[%c0_32, %c0_33, %c0_34, %c0_35] : memref<1x3x8x128xf32, #tpu.memory_space<vmem>>, vector<1x3x8x128xf32>
      %46 = vector.shape_cast %45 : vector<1x3x8x128xf32> to vector<3x8x128xf32>
      %47 = vector.shape_cast %44 : vector<3x8x128xf32> to vector<1x3x8x128xf32>
      tpu.vector_store %arg4[%c0_32, %c0_33, %c0_34, %c0_35], %47 {strides = array<i32>} : memref<1x3x8x128xf32, #tpu.memory_space<vmem>>, vector<1x3x8x128xf32>,
    } else {
    }
    %cst = arith.constant 0.000000e+00 : f32
    %3 = vector.broadcast %cst : f32 to vector<8x128xf32>
    %c0_i32_1 = arith.constant 0 : i32
    %c16_i32 = arith.constant 16 : i32
    %4 = arith.muli %c0_i32_1, %c16_i32 : i32
    %5 = tpu.assume_multiple %4, 16 : i32
    %6 = arith.index_cast %5 : i32 to index
    %c0 = arith.constant 0 : index
    %7 = vector.load %arg2[%6, %c0] : memref<16x128xf32, #tpu.memory_space<vmem>>, vector<16x128xf32>
    %8 = arith.index_cast %5 : i32 to index
    %c0_2 = arith.constant 0 : index
    %9 = vector.load %arg3[%8, %c0_2] : memref<16x128xf32, #tpu.memory_space<vmem>>, vector<16x128xf32>
    %cst_3 = arith.constant 5.000000e-01 : f32
    %10 = vector.broadcast %cst_3 : f32 to vector<16x128xf32>
    %11 = arith.mulf %10, %7 : vector<16x128xf32>
    %12 = math.tanh %11 : vector<16x128xf32>
    %cst_4 = arith.constant 5.000000e-01 : f32
    %13 = vector.broadcast %cst_4 : f32 to vector<16x128xf32>
    %14 = arith.mulf %13, %12 : vector<16x128xf32>
    %cst_5 = arith.constant 5.000000e-01 : f32
    %15 = vector.broadcast %cst_5 : f32 to vector<16x128xf32>
    %16 = arith.addf %14, %15 : vector<16x128xf32>
    %17 = vector.shape_cast %16 : vector<16x128xf32> to vector<2x8x128xf32>
    %18 = vector.shape_cast %9 : vector<16x128xf32> to vector<2x8x128xf32>
    %19 = arith.mulf %17, %18 : vector<2x8x128xf32>
    %cst_6 = arith.constant dense<0.000000e+00> : vector<8x128xf32>
    %20 = vector.multi_reduction <add>, %19, %cst_6 [0] : vector<2x8x128xf32> to vector<8x128xf32>
    %cst_7 = arith.constant dense<0.000000e+00> : vector<8x128xf32>
    %21 = vector.multi_reduction <add>, %17, %cst_7 [0] : vector<2x8x128xf32> to vector<8x128xf32>
    %cst_8 = arith.constant dense<0.000000e+00> : vector<8x128xf32>
    %22 = vector.multi_reduction <add>, %18, %cst_8 [0] : vector<2x8x128xf32> to vector<8x128xf32>
    %23 = arith.addf %3, %20 : vector<8x128xf32>
    %24 = arith.addf %3, %21 : vector<8x128xf32>
    %25 = arith.addf %3, %22 : vector<8x128xf32>
    %c1_i32 = arith.constant 1 : i32
    %c0_9 = arith.constant 0 : index
    %c0_10 = arith.constant 0 : index
    %c0_11 = arith.constant 0 : index
    %c0_12 = arith.constant 0 : index
    %26 = vector.load %arg4[%c0_9, %c0_10, %c0_11, %c0_12] : memref<1x3x8x128xf32, #tpu.memory_space<vmem>>, vector<1x1x8x128xf32>
    %27 = vector.shape_cast %26 : vector<1x1x8x128xf32> to vector<8x128xf32>
    %28 = arith.addf %27, %23 : vector<8x128xf32>
    %c0_13 = arith.constant 0 : index
    %c0_14 = arith.constant 0 : index
    %c0_15 = arith.constant 0 : index
    %c0_16 = arith.constant 0 : index
    %29 = vector.load %arg4[%c0_13, %c0_14, %c0_15, %c0_16] : memref<1x3x8x128xf32, #tpu.memory_space<vmem>>, vector<1x1x8x128xf32>
    %30 = vector.shape_cast %29 : vector<1x1x8x128xf32> to vector<8x128xf32>
    %31 = vector.shape_cast %28 : vector<8x128xf32> to vector<1x1x8x128xf32>
    tpu.vector_store %arg4[%c0_13, %c0_14, %c0_15, %c0_16], %31 {strides = array<i32>} : memref<1x3x8x128xf32, #tpu.memory_space<vmem>>, vector<1x1x8x128xf32>,
    %c0_17 = arith.constant 0 : index
    %c1 = arith.constant 1 : index
    %c0_18 = arith.constant 0 : index
    %c0_19 = arith.constant 0 : index
    %32 = vector.load %arg4[%c0_17, %c1, %c0_18, %c0_19] : memref<1x3x8x128xf32, #tpu.memory_space<vmem>>, vector<1x1x8x128xf32>
    %33 = vector.shape_cast %32 : vector<1x1x8x128xf32> to vector<8x128xf32>
    %34 = arith.addf %33, %24 : vector<8x128xf32>
    %c0_20 = arith.constant 0 : index
    %c1_21 = arith.constant 1 : index
    %c0_22 = arith.constant 0 : index
    %c0_23 = arith.constant 0 : index
    %35 = vector.load %arg4[%c0_20, %c1_21, %c0_22, %c0_23] : memref<1x3x8x128xf32, #tpu.memory_space<vmem>>, vector<1x1x8x128xf32>
    %36 = vector.shape_cast %35 : vector<1x1x8x128xf32> to vector<8x128xf32>
    %37 = vector.shape_cast %34 : vector<8x128xf32> to vector<1x1x8x128xf32>
    tpu.vector_store %arg4[%c0_20, %c1_21, %c0_22, %c0_23], %37 {strides = array<i32>} : memref<1x3x8x128xf32, #tpu.memory_space<vmem>>, vector<1x1x8x128xf32>,
    %c0_24 = arith.constant 0 : index
    %c2 = arith.constant 2 : index
    %c0_25 = arith.constant 0 : index
    %c0_26 = arith.constant 0 : index
    %38 = vector.load %arg4[%c0_24, %c2, %c0_25, %c0_26] : memref<1x3x8x128xf32, #tpu.memory_space<vmem>>, vector<1x1x8x128xf32>
    %39 = vector.shape_cast %38 : vector<1x1x8x128xf32> to vector<8x128xf32>
    %40 = arith.addf %39, %25 : vector<8x128xf32>
    %c0_27 = arith.constant 0 : index
    %c2_28 = arith.constant 2 : index
    %c0_29 = arith.constant 0 : index
    %c0_30 = arith.constant 0 : index
    %41 = vector.load %arg4[%c0_27, %c2_28, %c0_29, %c0_30] : memref<1x3x8x128xf32, #tpu.memory_space<vmem>>, vector<1x1x8x128xf32>
    %42 = vector.shape_cast %41 : vector<1x1x8x128xf32> to vector<8x128xf32>
    %43 = vector.shape_cast %40 : vector<8x128xf32> to vector<1x1x8x128xf32>
    tpu.vector_store %arg4[%c0_27, %c2_28, %c0_29, %c0_30], %43 {strides = array<i32>} : memref<1x3x8x128xf32, #tpu.memory_space<vmem>>, vector<1x1x8x128xf32>,
    return
  }
  func.func @transform_0(%arg0: i32, %arg1: i32) -> (i32, i32) {
    %c1_i32 = arith.constant 1 : i32
    %0 = arith.muli %arg0, %c1_i32 : i32
    %1 = arith.addi %0, %arg1 : i32
    %c0_i32 = arith.constant 0 : i32
    %2 = arith.minsi %1, %c0_i32 : i32
    %c0_i32_0 = arith.constant 0 : i32
    %c0_i32_1 = arith.constant 0 : i32
    return %2, %c0_i32_0 : i32, i32
  }
  func.func @transform_1(%arg0: i32, %arg1: i32) -> (i32, i32) {
    %c1_i32 = arith.constant 1 : i32
    %0 = arith.muli %arg0, %c1_i32 : i32
    %1 = arith.addi %0, %arg1 : i32
    %c0_i32 = arith.constant 0 : i32
    %2 = arith.minsi %1, %c0_i32 : i32
    %c0_i32_0 = arith.constant 0 : i32
    %c0_i32_1 = arith.constant 0 : i32
    return %2, %c0_i32_0 : i32, i32
  }
  func.func @transform_2(%arg0: i32, %arg1: i32) -> (i32, i32, i32, i32) {
    %c0_i32 = arith.constant 0 : i32
    %c0_i32_0 = arith.constant 0 : i32
    %c0_i32_1 = arith.constant 0 : i32
    %c0_i32_2 = arith.constant 0 : i32
    return %arg0, %c0_i32, %c0_i32_0, %c0_i32_1 : i32, i32, i32, i32
  }
}

</mosaic_0001>

<llo_original>
// kernel: tpu_custom_call.1
$region0: #{tpu_custom_call.1}
  #allocation0 [shape = 'u32[]', space=smem, size = 0x4, offset = 0x4, fixed_abs, tag = 'smem constant byte address 0x4 - core index']
  #allocation1 [shape = 'u32[144,128]{1,0:T(1,128)}', space=vmem, size = 0x12000, scoped, tag = 'internal scratch']
  %s0 = inlined_call_operand.hbm [shape: f32[16,128], index: 0, kind: input, shape index: {}]
  %s1 = inlined_call_operand.hbm [shape: f32[16,128], index: 1, kind: input, shape index: {}]
  %s2 = inlined_call_operand.hbm [shape: f32[1,3,8,128], index: 2, kind: output, shape index: {}]
  %s3 = sld [smem:[#allocation0]]
  $region30: #{tpu_custom_call.1} parent=0
    _
  %s5 = ssub.s32 1, %s3
  %s6 = scalar_select 0, %s5, %s3
  $region1: #{tpu_custom_call.1} parent=0
    #allocation2 [shape = 'u8[8192]{0}', space=vmem, size = 0x2000, scoped, tag = 'input window, operand 0, single buffered']
    #allocation3 [shape = 's32[1]{0}', space=sflag, size = 0x4, scoped, tag = 'scoped memory for tpu_custom_call.1']
    #allocation4 [shape = 's32[1]{0}', space=sflag, size = 0x4, scoped, tag = 'scoped memory for tpu_custom_call.1']
    #allocation5 [shape = 'u8[8192]{0}', space=vmem, size = 0x2000, scoped, tag = 'input window, operand 1, single buffered']
    #allocation6 [shape = 's32[1]{0}', space=sflag, size = 0x4, scoped, tag = 'scoped memory for tpu_custom_call.1']
    #allocation7 [shape = 'u8[12288]{0}', space=vmem, size = 0x3000, scoped, tag = 'output window, operand 0, single buffered']
    %7 = vsyncpa [#allocation3], 0
    %8 = vsyncpa [#allocation6], 0
    %9 = vsyncpa [#allocation4], 0
    // Predicated region
    $region2: #{tpu_custom_call.1} parent=1 // pred_check
      _
    $region3: #{tpu_custom_call.1} parent=1 // pred_check_branch
      %11 = sbr.rel (0) target = $region5
    $region4: #{tpu_custom_call.1} parent=1 // pred_region
      %s12 = sadd.s32 0, 0
      %p13 = scmp.lt.s32.totalorder %s12, 0
      %s14 = scalar_select %p13, %s12, 0
      %s15 = smul.u32 2, %s14
      %s17 = ssub.s32 256, 256
      %18 = vsyncadd [#allocation3], %s17
      %s19 = smul.addr %s15, 128
      %s20 = scalar_lea.hbm %s0, %s19
      %s21 = sshll.u32 [#allocation2], 4
      %s22 = int_to_ptr.vmem [resolvable:$true] %s21
      %27 = dma.hbm_to_vmem [thread:$0]  %s20, 256, %s22, [#allocation3], 128, 128, 8
    $region5: #{tpu_custom_call.1} parent=1 // pred_fallthru
      _
    // Predicated region
    $region6: #{tpu_custom_call.1} parent=1 // pred_check
      _
    $region7: #{tpu_custom_call.1} parent=1 // pred_check_branch
      %29 = sbr.rel (0) target = $region9
    $region8: #{tpu_custom_call.1} parent=1 // pred_region
      %s30 = sadd.s32 0, 0
      %p31 = scmp.lt.s32.totalorder %s30, 0
      %s32 = scalar_select %p31, %s30, 0
      %s33 = smul.u32 2, %s32
      %s35 = ssub.s32 256, 256
      %36 = vsyncadd [#allocation6], %s35
      %s37 = smul.addr %s33, 128
      %s38 = scalar_lea.hbm %s1, %s37
      %s39 = sshll.u32 [#allocation5], 4
      %s40 = int_to_ptr.vmem [resolvable:$true] %s39
      %45 = dma.hbm_to_vmem [thread:$0]  %s38, 256, %s40, [#allocation6], 128, 128, 8
    $region9: #{tpu_custom_call.1} parent=1 // pred_fallthru
      _
    // Predicated region
    $region10: #{tpu_custom_call.1} parent=1 // pred_check
      _
    $region11: #{tpu_custom_call.1} parent=1 // pred_check_branch
      %47 = sbr.rel (0) target = $region13
    $region12: #{tpu_custom_call.1} parent=1 // pred_region
      %48 = dma.done [#allocation3], 256
    $region13: #{tpu_custom_call.1} parent=1 // pred_fallthru
      _
    // Predicated region
    $region14: #{tpu_custom_call.1} parent=1 // pred_check
      _
    $region15: #{tpu_custom_call.1} parent=1 // pred_check_branch
      %50 = sbr.rel (0) target = $region17
    $region16: #{tpu_custom_call.1} parent=1 // pred_region
      %51 = dma.done [#allocation6], 256
    $region17: #{tpu_custom_call.1} parent=1 // pred_fallthru
      _
    %s52 = sadd.s32 0, 0
    %p53 = scmp.lt.s32.totalorder %s52, 0
    %s54 = scalar_select %p53, %s52, 0
    %s55 = smul.u32 2, %s54
    %s56 = sadd.s32 0, 0
    %p57 = scmp.lt.s32.totalorder %s56, 0
    %s58 = scalar_select %p57, %s56, 0
    %s59 = smul.u32 2, %s58
    %p60 = scmp.eq.s32.totalorder 0, 0
    // Predicated region
    $region18: #{tpu_custom_call.1} parent=1 // pred_check
      %p61 = pneg %p60
    $region19: #{tpu_custom_call.1} parent=1 // pred_check_branch
      %63 = sbr.rel (%p61) target = $region21
    $region20: #{tpu_custom_call.1} parent=1 // pred_region
      %64 = vst [vmem:[#allocation7] sm:$0xff] 0.0
      %65 = vst [vmem:[#allocation7 + $0x8] sm:$0xff] 0.0
      %66 = vst [vmem:[#allocation7 + $0x10] sm:$0xff] 0.0
    $region21: #{tpu_custom_call.1} parent=1 // pred_fallthru
      _
    %v67 = vld [vmem:[#allocation2] sm:$0xff]
    %v68 = vld [vmem:[#allocation2 + $0x8] sm:$0xff]
    %v69 = vld [vmem:[#allocation5] sm:$0xff]
    %v70 = vld [vmem:[#allocation5 + $0x8] sm:$0xff]
    %v71 = vmul.f32 %v67, 0.5
    %v72 = vmul.f32 %v68, 0.5
    %v73 = vtanh.pop %v71
    %v74 = vtanh.pop %v72
    %v75 = vmul.f32 %v73, 0.5
    %v76 = vmul.f32 %v74, 0.5
    %v77 = vadd.f32 %v75, 0.5
    %v78 = vadd.f32 %v76, 0.5
    %v79 = vmul.f32 %v77, %v69
    %v80 = vmul.f32 %v78, %v70
    %v81 = vadd.f32 %v79, %v80
    %v82 = vadd.f32 %v77, %v78
    %v83 = vadd.f32 %v69, %v70
    %v84 = vadd.f32 %v81, 0.0
    %v85 = vadd.f32 %v82, 0.0
    %v86 = vadd.f32 %v83, 0.0
    %v87 = vld [vmem:[#allocation7] sm:$0xff]
    %v88 = vadd.f32 %v87, %v84
    %89 = vst [vmem:[#allocation7] sm:$0xff] %v88
    %s90 = scalar_lea.vmem [#allocation7], 8
    %v91 = vld [vmem:[%s90] sm:$0xff]
    %v92 = vadd.f32 %v91, %v85
    %93 = vst [vmem:[%s90] sm:$0xff] %v92
    %s94 = scalar_lea.vmem [#allocation7], 16
    %v95 = vld [vmem:[%s94] sm:$0xff]
    %v96 = vadd.f32 %v95, %v86
    %97 = vst [vmem:[%s94] sm:$0xff] %v96
    // Predicated region
    $region22: #{tpu_custom_call.1} parent=1 // pred_check
      _
    $region23: #{tpu_custom_call.1} parent=1 // pred_check_branch
      %99 = sbr.rel (0) target = $region25
    $region24: #{tpu_custom_call.1} parent=1 // pred_region
      %s101 = ssub.s32 384, 384
      %102 = vsyncadd [#allocation4], %s101
      %s103 = sshll.u32 [#allocation7], 4
      %s104 = int_to_ptr.vmem [resolvable:$true] %s103
      %109 = dma.vmem_to_hbm [thread:$0]  %s104, 384, %s2, [#allocation4], 128, 128, 8
    $region25: #{tpu_custom_call.1} parent=1 // pred_fallthru
      _
    // Predicated region
    $region26: #{tpu_custom_call.1} parent=1 // pred_check
      _
    $region27: #{tpu_custom_call.1} parent=1 // pred_check_branch
      %111 = sbr.rel (0) target = $region29
    $region28: #{tpu_custom_call.1} parent=1 // pred_region
      %112 = dma.done [#allocation4], 384
    $region29: #{tpu_custom_call.1} parent=1 // pred_fallthru
      _
    %113 = vsyncpa [#allocation3], 1
    %114 = vsyncpa [#allocation6], 1
    %115 = vsyncpa [#allocation4], 1

</llo_original>
